<compile_context>
chip_gen: v7x
topology: tpu7x:2x2x1
jax: 0.10.0
libtpu: 0.0.40
codegen_flags: <defaults>
</compile_context>

<pallas_src>
import functools

import jax
import jax.numpy as jnp
from jax.experimental import pallas as pl
from jax.experimental.pallas import tpu as pltpu

TEMPERATURE = 0.5
EPS = 1e-12  # torch F.normalize default eps (applied as a clamp on the norm)

_VMEM_BUDGET = 40 * 2**20  # conservative: leaves headroom inside v7x's 64 MiB per TC


def _contrastive_loss_kernel(zi_ref, zjd_ref, zj_ref, loss_ref, m_scr, l_scr, *, inv_temp):
    f32 = jnp.float32
    ki = pl.program_id(1)

    @pl.when(ki == 0)
    def _init():
        m_scr[...] = jnp.full(m_scr.shape, -jnp.inf, dtype=f32)
        l_scr[...] = jnp.zeros(l_scr.shape, dtype=f32)

    # Normalize the query tile (torch F.normalize semantics: x / max(||x||, eps), done as
    # rsqrt on the eps^2-clamped sum of squares -> EUP). 1/temperature is folded into the
    # per-row scale so neither the logits nor the diag need an extra multiply.
    zi = zi_ref[...].astype(f32)                                             # (TQ, D)
    scale = jax.lax.rsqrt(
        jnp.maximum(jnp.sum(zi * zi, axis=-1, keepdims=True), EPS * EPS)) * inv_temp
    zi_bf = (zi * scale).astype(jnp.bfloat16)                                # (TQ, D)

    # Logits tile on the MXU: bf16 operands, f32 accumulate. Contraction is over the last
    # (lane) dim of BOTH operands so no key transpose is materialized per step.
    s = jax.lax.dot_general(
        zi_bf, zj_ref[...],
        dimension_numbers=(((1,), (1,)), ((), ())),
        preferred_element_type=f32)                                          # (TQ, TK)

    # Online (flash-style) logsumexp across key tiles; (TQ,1) running state in VMEM scratch.
    m_prev = m_scr[...]
    m_new = jnp.maximum(m_prev, jnp.max(s, axis=-1, keepdims=True))
    alpha = jnp.exp(m_prev - m_new)
    l_scr[...] = alpha * l_scr[...] + jnp.sum(jnp.exp(s - m_new), axis=-1, keepdims=True)
    m_scr[...] = m_new

    @pl.when(ki == pl.num_programs(1) - 1)
    def _finalize():
        # Target (diagonal) logit from the same bf16-rounded operands the MXU saw, so
        # lse and diag are consistent. O(TQ*D) elementwise, no (B,B) iota/where masks.
        diag = jnp.sum(zi_bf.astype(f32) * zjd_ref[...].astype(f32),
                       axis=-1, keepdims=True)                               # (TQ, 1)
        loss_ref[...] = m_scr[...] + jnp.log(l_scr[...]) - diag


def _estimate_vmem(tq, tk, d):
    # Double-buffered pipeline inputs + in-kernel (TQ,TK) f32 logits / exp temporaries.
    keys = 2 * tk * d * 2          # bf16 normalized key tile
    zjd = 2 * tq * d * 2           # bf16 aligned key tile (diag path)
    zi = 2 * tq * d * 4            # f32 raw query tile
    logits = 2 * tq * tk * 4       # f32 logits tile + exp temp
    out = 2 * tq * 4
    scratch = 2 * tq * 4 * 2
    return keys + zjd + zi + logits + out + scratch


def _divisor_tile(n, prefs):
    for t in prefs:
        if t <= n and n % t == 0:
            return t
    return n


def _pick_tiles(batch, dim, row_tile=None, key_tile=None):
    # Query tile: prefer 256 (matches the 256-wide MXU on v6e/v7x; 2x128 on v5e) and keep
    # the (TQ, TK) f32 logits tile a few MiB.
    if row_tile is not None:
        if batch % row_tile != 0:
            raise ValueError(f"row_tile={row_tile} must divide batch={batch}")
        tq = row_tile
    else:
        tq = _divisor_tile(batch, (256, 128, 512, 64, 32, 16, 8))

    # Key tile: keep all keys resident (TK = B, fetched once thanks to the constant index
    # map) whenever the VMEM budget allows; otherwise tile the key axis and rely on the
    # online-softmax path.
    if key_tile is not None:
        if batch % key_tile != 0:
            raise ValueError(f"key_tile={key_tile} must divide batch={batch}")
        tk = key_tile
    else:
        tk = batch
        if _estimate_vmem(tq, tk, dim) > _VMEM_BUDGET:
            for cand in (4096, 2048, 1024, 512, 256, 128):
                if cand < batch and batch % cand == 0 and \
                        _estimate_vmem(tq, cand, dim) <= _VMEM_BUDGET:
                    tk = cand
                    break
            else:
                tk = _divisor_tile(batch, (128, 64, 32, 16, 8))
    return tq, tk


def contrastive_loss(z_i, z_j, temperature=TEMPERATURE, row_tile=None, key_tile=None):
    assert z_i.shape == z_j.shape and z_i.ndim == 2
    B, D = z_i.shape
    tq, tk = _pick_tiles(B, D, row_tile, key_tile)
    grid = (B // tq, B // tk)

    # Hoisted one-time key preparation (review item #1/#2): f32 normalization, stored as
    # bf16 so the resident key block is fed straight into the MXU and its DMA/VMEM cost
    # is halved. The per-grid-step key work in the kernel is gone entirely.
    zj32 = z_j.astype(jnp.float32)
    zj_n = (zj32 * jax.lax.rsqrt(
        jnp.maximum(jnp.sum(zj32 * zj32, axis=1, keepdims=True), EPS * EPS))
            ).astype(jnp.bfloat16)

    kernel = functools.partial(_contrastive_loss_kernel, inv_temp=1.0 / float(temperature))

    est = _estimate_vmem(tq, tk, D)
    vmem_limit = int(min(56 * 2**20, max(int(est * 1.3) + (2 << 20), 32 * 2**20)))

    per_row = pl.pallas_call(
        kernel,
        out_shape=jax.ShapeDtypeStruct((B, 1), jnp.float32),
        grid_spec=pltpu.PrefetchScalarGridSpec(
            num_scalar_prefetch=0,
            grid=grid,
            in_specs=[
                pl.BlockSpec((tq, D), lambda qi, ki: (qi, 0)),  # raw z_i query tile
                pl.BlockSpec((tq, D), lambda qi, ki: (qi, 0)),  # aligned normalized keys (diag)
                pl.BlockSpec((tk, D), lambda qi, ki: (ki, 0)),  # normalized bf16 key tile
            ],
            out_specs=pl.BlockSpec((tq, 1), lambda qi, ki: (qi, 0)),
            scratch_shapes=[
                pltpu.VMEM((tq, 1), jnp.float32),  # running max (online softmax)
                pltpu.VMEM((tq, 1), jnp.float32),  # running sum-exp
            ],
        ),
        compiler_params=pltpu.CompilerParams(
            dimension_semantics=("parallel", "arbitrary"),
            vmem_limit_bytes=vmem_limit,
        ),
    )(z_i, zj_n, zj_n)

    # TODO(synk): if B ever needs padding to a tile multiple, mask padded KEY columns to
    # -inf inside the kernel and drop padded rows from this mean (not just the mean).
    return jnp.mean(per_row)


def _reference_loss(z_i, z_j, temperature=TEMPERATURE):
    zi = z_i / jnp.maximum(jnp.linalg.norm(z_i, axis=1, keepdims=True), EPS)
    zj = z_j / jnp.maximum(jnp.linalg.norm(z_j, axis=1, keepdims=True), EPS)
    logits = (zi @ zj.T) / temperature
    lse = jax.scipy.special.logsumexp(logits, axis=-1)
    return jnp.mean(lse - jnp.diagonal(logits))


if __name__ == "__main__":
    key = jax.random.PRNGKey(0)
    k1, k2 = jax.random.split(key)
    B, D = 32, 32
    z_i = jax.random.normal(k1, (B, D), dtype=jnp.float32)
    z_j = jax.random.normal(k2, (B, D), dtype=jnp.float32)

    ref = _reference_loss(z_i, z_j)

    # Multi-step grid: 2 query tiles ("parallel") x 2 key tiles (online softmax, "arbitrary").
    loss = contrastive_loss(z_i, z_j, row_tile=16, key_tile=16)
    jax.block_until_ready(loss)
    # bf16 MXU operands (f32 accumulate) -> small tolerance vs the f32 reference.
    assert jnp.allclose(loss, ref, rtol=2e-2, atol=2e-2), (loss, ref)

    # Auto-tiled path (keys fully resident, single key step at this size).
    loss_auto = contrastive_loss(z_i, z_j)
    jax.block_until_ready(loss_auto)
    assert jnp.allclose(loss_auto, ref, rtol=2e-2, atol=2e-2), (loss_auto, ref)

    print("KERNEL_OK")
</pallas_src>

<mosaic_0001>
module attributes {stable_mosaic.version = 11 : i64} {
  func.func @_contrastive_loss_kernel(%arg0: i32, %arg1: i32, %arg2: memref<16x32xf32, #tpu.memory_space<vmem>>, %arg3: memref<16x32xbf16, #tpu.memory_space<vmem>>, %arg4: memref<16x32xbf16, #tpu.memory_space<vmem>>, %arg5: memref<16x1xf32, #tpu.memory_space<vmem>>, %arg6: memref<16x1xf32, #tpu.memory_space<vmem>>, %arg7: memref<16x1xf32, #tpu.memory_space<vmem>>) attributes {dimension_semantics = [#tpu.dimension_semantics<parallel>, #tpu.dimension_semantics<arbitrary>], iteration_bounds = array<i64: 2, 2>, scalar_prefetch = 0 : i64, scratch_operands = 2 : i64, tpu.core_type = #tpu.core_type<tc>, window_params = [{transform_indices = @transform_0, window_bounds = array<i64: 16, 32>}, {transform_indices = @transform_1, window_bounds = array<i64: 16, 32>}, {transform_indices = @transform_2, window_bounds = array<i64: 16, 32>}, {transform_indices = @transform_3, window_bounds = array<i64: 16, 1>}]} {
    %c0_i32 = arith.constant 0 : i32
    %0 = arith.cmpi eq, %arg1, %c0_i32 : i32
    %1 = arith.extui %0 : i1 to i32
    %c0_i32_0 = arith.constant 0 : i32
    %2 = arith.cmpi ne, %1, %c0_i32_0 : i32
    scf.if %2 {
      %cst_18 = arith.constant 0xFF800000 : f32
      %36 = vector.broadcast %cst_18 : f32 to vector<16x1xf32>
      %c0_19 = arith.constant 0 : index
      %c0_20 = arith.constant 0 : index
      %37 = vector.load %arg6[%c0_19, %c0_20] : memref<16x1xf32, #tpu.memory_space<vmem>>, vector<16x1xf32>
      tpu.vector_store %arg6[%c0_19, %c0_20], %36 {strides = array<i32>} : memref<16x1xf32, #tpu.memory_space<vmem>>, vector<16x1xf32>,
      %cst_21 = arith.constant 0.000000e+00 : f32
      %38 = vector.broadcast %cst_21 : f32 to vector<16x1xf32>
      %c0_22 = arith.constant 0 : index
      %c0_23 = arith.constant 0 : index
      %39 = vector.load %arg7[%c0_22, %c0_23] : memref<16x1xf32, #tpu.memory_space<vmem>>, vector<16x1xf32>
      tpu.vector_store %arg7[%c0_22, %c0_23], %38 {strides = array<i32>} : memref<16x1xf32, #tpu.memory_space<vmem>>, vector<16x1xf32>,
    } else {
    }
    %c0 = arith.constant 0 : index
    %c0_1 = arith.constant 0 : index
    %3 = vector.load %arg2[%c0, %c0_1] : memref<16x32xf32, #tpu.memory_space<vmem>>, vector<16x32xf32>
    %4 = arith.mulf %3, %3 : vector<16x32xf32>
    %cst = arith.constant dense<0.000000e+00> : vector<16xf32>
    %5 = vector.multi_reduction <add>, %4, %cst [1] : vector<16x32xf32> to vector<16xf32>
    %6 = vector.shape_cast %5 : vector<16xf32> to vector<16x1xf32>
    %cst_2 = arith.constant 1.000000e-24 : f32
    %7 = vector.broadcast %cst_2 : f32 to vector<16x1xf32>
    %8 = arith.maximumf %6, %7 : vector<16x1xf32>
    %9 = math.rsqrt %8 : vector<16x1xf32>
    %cst_3 = arith.constant 2.000000e+00 : f32
    %10 = vector.broadcast %cst_3 : f32 to vector<16x1xf32>
    %11 = arith.mulf %9, %10 : vector<16x1xf32>
    %12 = vector.broadcast %11 : vector<16x1xf32> to vector<16x32xf32>
    %13 = arith.mulf %3, %12 : vector<16x32xf32>
    %14 = arith.truncf %13 : vector<16x32xf32> to vector<16x32xbf16>
    %c0_4 = arith.constant 0 : index
    %c0_5 = arith.constant 0 : index
    %15 = vector.load %arg4[%c0_4, %c0_5] : memref<16x32xbf16, #tpu.memory_space<vmem>>, vector<16x32xbf16>
    %cst_6 = arith.constant dense<0.000000e+00> : vector<16x16xf32>
    %16 = tpu.matmul %14, %15, %cst_6 {dimension_numbers = #tpu.dot_dimension_numbers<[1], [1], [0], [0], [0, 0, 1, 0], [], []>} : vector<16x32xbf16>, vector<16x32xbf16>, vector<16x16xf32> -> vector<16x16xf32>
    %c0_7 = arith.constant 0 : index
    %c0_8 = arith.constant 0 : index
    %17 = vector.load %arg6[%c0_7, %c0_8] : memref<16x1xf32, #tpu.memory_space<vmem>>, vector<16x1xf32>
    %cst_9 = arith.constant dense<0xFF800000> : vector<16xf32>
    %18 = vector.multi_reduction <maximumf>, %16, %cst_9 [1] : vector<16x16xf32> to vector<16xf32>
    %19 = vector.shape_cast %18 : vector<16xf32> to vector<16x1xf32>
    %20 = arith.maximumf %17, %19 : vector<16x1xf32>
    %21 = arith.subf %17, %20 : vector<16x1xf32>
    %22 = math.exp %21 : vector<16x1xf32>
    %c0_10 = arith.constant 0 : index
    %c0_11 = arith.constant 0 : index
    %23 = vector.load %arg7[%c0_10, %c0_11] : memref<16x1xf32, #tpu.memory_space<vmem>>, vector<16x1xf32>
    %24 = arith.mulf %22, %23 : vector<16x1xf32>
    %25 = vector.broadcast %20 : vector<16x1xf32> to vector<16x16xf32>
    %26 = arith.subf %16, %25 : vector<16x16xf32>
    %27 = math.exp %26 : vector<16x16xf32>
    %cst_12 = arith.constant dense<0.000000e+00> : vector<16xf32>
    %28 = vector.multi_reduction <add>, %27, %cst_12 [1] : vector<16x16xf32> to vector<16xf32>
    %29 = vector.shape_cast %28 : vector<16xf32> to vector<16x1xf32>
    %30 = arith.addf %24, %29 : vector<16x1xf32>
    %c0_13 = arith.constant 0 : index
    %c0_14 = arith.constant 0 : index
    %31 = vector.load %arg7[%c0_13, %c0_14] : memref<16x1xf32, #tpu.memory_space<vmem>>, vector<16x1xf32>
    tpu.vector_store %arg7[%c0_13, %c0_14], %30 {strides = array<i32>} : memref<16x1xf32, #tpu.memory_space<vmem>>, vector<16x1xf32>,
    %c0_15 = arith.constant 0 : index
    %c0_16 = arith.constant 0 : index
    %32 = vector.load %arg6[%c0_15, %c0_16] : memref<16x1xf32, #tpu.memory_space<vmem>>, vector<16x1xf32>
    tpu.vector_store %arg6[%c0_15, %c0_16], %20 {strides = array<i32>} : memref<16x1xf32, #tpu.memory_space<vmem>>, vector<16x1xf32>,
    %c1_i32 = arith.constant 1 : i32
    %33 = arith.cmpi eq, %arg1, %c1_i32 : i32
    %34 = arith.extui %33 : i1 to i32
    %c0_i32_17 = arith.constant 0 : i32
    %35 = arith.cmpi ne, %34, %c0_i32_17 : i32
    scf.if %35 {
      %36 = arith.extf %14 : vector<16x32xbf16> to vector<16x32xf32>
      %c0_18 = arith.constant 0 : index
      %c0_19 = arith.constant 0 : index
      %37 = vector.load %arg3[%c0_18, %c0_19] : memref<16x32xbf16, #tpu.memory_space<vmem>>, vector<16x32xbf16>
      %38 = arith.extf %37 : vector<16x32xbf16> to vector<16x32xf32>
      %39 = arith.mulf %36, %38 : vector<16x32xf32>
      %cst_20 = arith.constant dense<0.000000e+00> : vector<16xf32>
      %40 = vector.multi_reduction <add>, %39, %cst_20 [1] : vector<16x32xf32> to vector<16xf32>
      %41 = vector.shape_cast %40 : vector<16xf32> to vector<16x1xf32>
      %c0_21 = arith.constant 0 : index
      %c0_22 = arith.constant 0 : index
      %42 = vector.load %arg6[%c0_21, %c0_22] : memref<16x1xf32, #tpu.memory_space<vmem>>, vector<16x1xf32>
      %c0_23 = arith.constant 0 : index
      %c0_24 = arith.constant 0 : index
      %43 = vector.load %arg7[%c0_23, %c0_24] : memref<16x1xf32, #tpu.memory_space<vmem>>, vector<16x1xf32>
      %44 = math.log %43 : vector<16x1xf32>
      %45 = arith.addf %42, %44 : vector<16x1xf32>
      %46 = arith.subf %45, %41 : vector<16x1xf32>
      %c0_25 = arith.constant 0 : index
      %c0_26 = arith.constant 0 : index
      %47 = vector.load %arg5[%c0_25, %c0_26] : memref<16x1xf32, #tpu.memory_space<vmem>>, vector<16x1xf32>
      tpu.vector_store %arg5[%c0_25, %c0_26], %46 {strides = array<i32>} : memref<16x1xf32, #tpu.memory_space<vmem>>, vector<16x1xf32>,
    } else {
    }
    return
  }
  func.func @transform_0(%arg0: i32, %arg1: i32) -> (i32, i32) {
    %c0_i32 = arith.constant 0 : i32
    %c0_i32_0 = arith.constant 0 : i32
    return %arg0, %c0_i32 : i32, i32
  }
  func.func @transform_1(%arg0: i32, %arg1: i32) -> (i32, i32) {
    %c0_i32 = arith.constant 0 : i32
    %c0_i32_0 = arith.constant 0 : i32
    return %arg0, %c0_i32 : i32, i32
  }
  func.func @transform_2(%arg0: i32, %arg1: i32) -> (i32, i32) {
    %c0_i32 = arith.constant 0 : i32
    %c0_i32_0 = arith.constant 0 : i32
    return %arg1, %c0_i32 : i32, i32
  }
  func.func @transform_3(%arg0: i32, %arg1: i32) -> (i32, i32) {
    %c0_i32 = arith.constant 0 : i32
    %c0_i32_0 = arith.constant 0 : i32
    return %arg0, %c0_i32 : i32, i32
  }
}

</mosaic_0001>

<llo_original>
// kernel: tpu_custom_call.1
$region0: #{tpu_custom_call.1}
  #allocation0 [shape = 'u32[]', space=smem, size = 0x4, offset = 0x4, fixed_abs, tag = 'smem constant byte address 0x4 - core index']
  #allocation1 [shape = 'u32[144,128]{1,0:T(1,128)}', space=vmem, size = 0x12000, scoped, tag = 'internal scratch']
  #allocation2 [shape = 'f32[16,1]{1,0:T(8,128)}', space=vmem, size = 0x2000, scoped, tag = 'scratch operand']
  #allocation3 [shape = 'f32[16,1]{1,0:T(8,128)}', space=vmem, size = 0x2000, scoped, tag = 'scratch operand']
  %s0 = inlined_call_operand.hbm [shape: f32[32,32], index: 0, kind: input, shape index: {}]
  %s1 = inlined_call_operand.hbm [shape: bf16[32,32], index: 1, kind: input, shape index: {}]
  %s2 = inlined_call_operand.hbm [shape: bf16[32,32], index: 2, kind: input, shape index: {}]
  %s3 = inlined_call_operand.vmem [shape: f32[32,1], index: 3, kind: output, shape index: {}]
  %s4 = sld [smem:[#allocation0]]
  $region65: #{tpu_custom_call.1} parent=0
    _
  %s6 = ssub.s32 1, %s4
  %s7 = scalar_select 0, %s6, %s4
  $region1: #{tpu_custom_call.1} parent=0
    #allocation4 [shape = 'u8[16384]{0}', space=vmem, size = 0x4000, scoped, tag = 'input window, operand 0']
    #allocation5 [shape = 's32[2]{0}', space=sflag, size = 0x8, scoped, tag = 'scoped memory for tpu_custom_call.1']
    #allocation6 [shape = 'u8[8192]{0}', space=vmem, size = 0x2000, scoped, tag = 'input window, operand 1']
    #allocation7 [shape = 's32[2]{0}', space=sflag, size = 0x8, scoped, tag = 'scoped memory for tpu_custom_call.1']
    #allocation8 [shape = 'u8[8192]{0}', space=vmem, size = 0x2000, scoped, tag = 'input window, operand 2']
    %8 = vsyncpa [#allocation5], 0
    %s9 = scalar_lea.sflag [#allocation5], 1
    %10 = vsyncpa %s9, 0
    %11 = vsyncpa [#allocation7], 0
    %s12 = scalar_lea.sflag [#allocation7], 1
    %13 = vsyncpa %s12, 0
    loop: start=0, step=1, limit=6
    $region2: #{tpu_custom_call.1} parent=1 // loop_pre_header
      _
    $region3: #{tpu_custom_call.1} parent=1 // loop_header
      %s15 = sphi 0, %s19
      %p16 = scmp.ge.s32.totalorder %s15, 6
      %s22 = sphi 0, %s34
      %s23 = sphi 0, %s30
      %s24 = sphi 0, %s22
      %s25 = sphi 0, %s23
      %s26 = sphi 0, %s24
      %s27 = sphi 0, %s25
      %s37 = sphi 0, %s39
      %s40 = sphi 0, %s37
      %s41 = sphi 0, %s40
      %s57 = sphi 0, %s41
      %s63 = sphi 0, %s65
      %s66 = sphi 0, %s63
      %s67 = sphi 0, %s66
      %s83 = sphi 0, %s67
      %s89 = sphi 0, %s91
      %s92 = sphi 0, %s89
      %s93 = sphi 0, %s92
      %s109 = sphi 0, %s93
      %s115 = sphi 0, %s117
      %s118 = sphi 0, %s115
      %s119 = sphi 0, %s118
      %s135 = sphi 0, %s119
    $region4: #{tpu_custom_call.1} parent=1 // loop_header_branch
      %18 = sbr.rel (%p16) target = $region8
    $region5: #{tpu_custom_call.1} parent=1 // loop_body
      %s20 = ssub.s32 %s15, 1
      %s21 = ssub.s32 %s15, 2
      %s28 = sadd.s32 1, %s23
      %p29 = scmp.ge.s32.totalorder %s28, 2
      %s30 = scalar_select %p29, 0, %s28
      %s31 = sadd.s32 1, %s22
      %s32 = scalar_select %p29, %s31, %s22
      %p33 = scmp.ge.s32.totalorder %s32, 2
      %s34 = scalar_select %p33, 0, %s32
      %s35 = ssub.s32 %s22, %s34
      %p36 = scmp.eq.s32.totalorder %s35, 0
      %s38 = sadd.s32 %s37, 1
      %s39 = scalar_select %p36, %s37, %s38
      %p42 = pneg %p36
      %p43 = scmp.eq.s32.totalorder %s15, 3
      %p44 = por %p42, %p43
      %p45 = scmp.ne.s32.totalorder %s37, %s40
      %p46 = scmp.eq.s32.totalorder %s15, 0
      %p47 = por %p45, %p46
      %p48 = scmp.ne.s32.totalorder %s37, %s40
      %p49 = scmp.eq.s32.totalorder %s20, 3
      %p50 = por %p48, %p49
      %p51 = scmp.ne.s32.totalorder %s40, %s41
      %p52 = scmp.eq.s32.totalorder %s20, 0
      %p53 = por %p51, %p52
      %p54 = scmp.ne.s32.totalorder %s40, %s41
      %p55 = scmp.eq.s32.totalorder %s21, 3
      %p56 = por %p54, %p55
      %p58 = scmp.ne.s32.totalorder %s41, %s57
      %p59 = scmp.eq.s32.totalorder %s21, 0
      %p60 = por %p58, %p59
      %s61 = ssub.s32 %s22, %s34
      %p62 = scmp.eq.s32.totalorder %s61, 0
      %s64 = sadd.s32 %s63, 1
      %s65 = scalar_select %p62, %s63, %s64
      %p68 = pneg %p62
      %p69 = scmp.eq.s32.totalorder %s15, 3
      %p70 = por %p68, %p69
      %p71 = scmp.ne.s32.totalorder %s63, %s66
      %p72 = scmp.eq.s32.totalorder %s15, 0
      %p73 = por %p71, %p72
      %p74 = scmp.ne.s32.totalorder %s63, %s66
      %p75 = scmp.eq.s32.totalorder %s20, 3
      %p76 = por %p74, %p75
      %p77 = scmp.ne.s32.totalorder %s66, %s67
      %p78 = scmp.eq.s32.totalorder %s20, 0
      %p79 = por %p77, %p78
      %p80 = scmp.ne.s32.totalorder %s66, %s67
      %p81 = scmp.eq.s32.totalorder %s21, 3
      %p82 = por %p80, %p81
      %p84 = scmp.ne.s32.totalorder %s67, %s83
      %p85 = scmp.eq.s32.totalorder %s21, 0
      %p86 = por %p84, %p85
      %s87 = ssub.s32 %s23, %s30
      %p88 = scmp.eq.s32.totalorder %s87, 0
      %s90 = sadd.s32 %s89, 1
      %s91 = scalar_select %p88, %s89, %s90
      %p94 = pneg %p88
      %p95 = scmp.eq.s32.totalorder %s15, 3
      %p96 = por %p94, %p95
      %p97 = scmp.ne.s32.totalorder %s89, %s92
      %p98 = scmp.eq.s32.totalorder %s15, 0
      %p99 = por %p97, %p98
      %p100 = scmp.ne.s32.totalorder %s89, %s92
      %p101 = scmp.eq.s32.totalorder %s20, 3
      %p102 = por %p100, %p101
      %p103 = scmp.ne.s32.totalorder %s92, %s93
      %p104 = scmp.eq.s32.totalorder %s20, 0
      %p105 = por %p103, %p104
      %p106 = scmp.ne.s32.totalorder %s92, %s93
      %p107 = scmp.eq.s32.totalorder %s21, 3
      %p108 = por %p106, %p107
      %p110 = scmp.ne.s32.totalorder %s93, %s109
      %p111 = scmp.eq.s32.totalorder %s21, 0
      %p112 = por %p110, %p111
      %s113 = ssub.s32 %s22, %s34
      %p114 = scmp.eq.s32.totalorder %s113, 0
      %s116 = sadd.s32 %s115, 1
      %s117 = scalar_select %p114, %s115, %s116
      %p120 = pneg %p114
      %p121 = scmp.eq.s32.totalorder %s15, 3
      %p122 = por %p120, %p121
      %p123 = scmp.ne.s32.totalorder %s115, %s118
      %p124 = scmp.eq.s32.totalorder %s15, 0
      %p125 = por %p123, %p124
      %p126 = scmp.ne.s32.totalorder %s115, %s118
      %p127 = scmp.eq.s32.totalorder %s20, 3
      %p128 = por %p126, %p127
      %p129 = scmp.ne.s32.totalorder %s118, %s119
      %p130 = scmp.eq.s32.totalorder %s20, 0
      %p131 = por %p129, %p130
      %p132 = scmp.ne.s32.totalorder %s118, %s119
      %p133 = scmp.eq.s32.totalorder %s21, 3
      %p134 = por %p132, %p133
      %p136 = scmp.ne.s32.totalorder %s119, %s135
      %p137 = scmp.eq.s32.totalorder %s21, 0
      %p138 = por %p136, %p137
      %p139 = scmp.le.s32.totalorder 1, %s15
      %p140 = scmp.lt.s32.totalorder %s15, 5
      %p141 = pnand %p139, %p140
      %p142 = pneg %p141
      // Predicated region
      $region9: #{tpu_custom_call.1} parent=5 // pred_check
        _
      $region10: #{tpu_custom_call.1} parent=5 // pred_check_branch
        %144 = sbr.rel (%p141) target = $region12
      $region11: #{tpu_custom_call.1} parent=5 // pred_region
        %s145 = ssub.s32 %s15, 1
      $region12: #{tpu_custom_call.1} parent=5 // pred_fallthru
        _
      %p146 = scmp.lt.s32.totalorder %s15, 4
      // Predicated region
      $region13: #{tpu_custom_call.1} parent=5 // pred_check
        %p147 = pneg %p146
      $region14: #{tpu_custom_call.1} parent=5 // pred_check_branch
        %149 = sbr.rel (%p147) target = $region16
      $region15: #{tpu_custom_call.1} parent=5 // pred_region
        // Predicated region
        $region17: #{tpu_custom_call.1} parent=15 // pred_check
          %p150 = pneg %p47
        $region18: #{tpu_custom_call.1} parent=15 // pred_check_branch
          %152 = sbr.rel (%p150) target = $region20
        $region19: #{tpu_custom_call.1} parent=15 // pred_region
          %s153 = sand.u32 %s37, 1
          %s154 = scalar_lea.sflag [#allocation5], %s153
          %s155 = sand.u32 %s37, 1
          %s156 = smul.addr %s155, 16
          %s157 = scalar_lea.vmem [#allocation4], %s156
          %s158 = smul.u32 2, %s22
          %s160 = ssub.s32 256, 256
          %161 = vsyncadd %s154, %s160
          %s162 = smul.addr %s158, 128
          %s163 = scalar_lea.hbm %s0, %s162
          %s164 = sshll.u32 %s157, 4
          %s165 = int_to_ptr.vmem [resolvable:$true] %s164
          %170 = dma.hbm_to_vmem [thread:$0]  %s163, 256, %s165, %s154, 128, 128, 8
        $region20: #{tpu_custom_call.1} parent=15 // pred_fallthru
          _
        // Predicated region
        $region21: #{tpu_custom_call.1} parent=15 // pred_check
          %p171 = pneg %p73
        $region22: #{tpu_custom_call.1} parent=15 // pred_check_branch
          %173 = sbr.rel (%p171) target = $region24
        $region23: #{tpu_custom_call.1} parent=15 // pred_region
          %s174 = sand.u32 %s15, 1
          %s175 = scalar_lea.sflag [#allocation7], %s174
          %s176 = sand.u32 %s63, 1
          %s177 = smul.addr %s176, 8
          %s178 = scalar_lea.vmem [#allocation6], %s177
          %s179 = smul.u32 2, %s22
          %s181 = ssub.s32 128, 128
          %182 = vsyncadd %s175, %s181
          %s183 = smul.addr %s179, 64
          %s184 = scalar_lea.hbm %s1, %s183
          %s185 = sshll.u32 %s178, 4
          %s186 = int_to_ptr.vmem [resolvable:$true] %s185
          %191 = dma.hbm_to_vmem [thread:$0]  %s184, 128, %s186, %s175, 64, 64, 4
        $region24: #{tpu_custom_call.1} parent=15 // pred_fallthru
          _
        // Predicated region
        $region25: #{tpu_custom_call.1} parent=15 // pred_check
          %p192 = pneg %p99
        $region26: #{tpu_custom_call.1} parent=15 // pred_check_branch
          %194 = sbr.rel (%p192) target = $region28
        $region27: #{tpu_custom_call.1} parent=15 // pred_region
          %s195 = sand.u32 %s15, 1
          %s196 = scalar_lea.sflag [#allocation7], %s195
          %s197 = sand.u32 %s89, 1
          %s198 = smul.addr %s197, 8
          %s199 = scalar_lea.vmem [#allocation8], %s198
          %s200 = smul.u32 2, %s23
          %s202 = ssub.s32 128, 128
          %203 = vsyncadd %s196, %s202
          %s204 = smul.addr %s200, 64
          %s205 = scalar_lea.hbm %s2, %s204
          %s206 = sshll.u32 %s199, 4
          %s207 = int_to_ptr.vmem [resolvable:$true] %s206
          %212 = dma.hbm_to_vmem [thread:$0]  %s205, 128, %s207, %s196, 64, 64, 4
        $region28: #{tpu_custom_call.1} parent=15 // pred_fallthru
          _
      $region16: #{tpu_custom_call.1} parent=5 // pred_fallthru
        _
      %p213 = scmp.le.s32.totalorder 1, %s15
      %p214 = scmp.lt.s32.totalorder %s15, 5
      %p215 = pnand %p213, %p214
      %p216 = pneg %p215
      // Predicated region
      $region29: #{tpu_custom_call.1} parent=5 // pred_check
        _
      $region30: #{tpu_custom_call.1} parent=5 // pred_check_branch
        %218 = sbr.rel (%p215) target = $region32
      $region31: #{tpu_custom_call.1} parent=5 // pred_region
        %s219 = ssub.s32 %s15, 1
        %s220 = sand.u32 %s40, 1
        %s221 = scalar_lea.sflag [#allocation5], %s220
        %s222 = sand.u32 %s40, 1
        %s223 = smul.addr %s222, 16
        %s224 = scalar_lea.vmem [#allocation4], %s223
        // Predicated region
        $region33: #{tpu_custom_call.1} parent=31 // pred_check
          %p225 = pneg %p53
        $region34: #{tpu_custom_call.1} parent=31 // pred_check_branch
          %227 = sbr.rel (%p225) target = $region36
        $region35: #{tpu_custom_call.1} parent=31 // pred_region
          %228 = dma.done %s221, 256
        $region36: #{tpu_custom_call.1} parent=31 // pred_fallthru
          _
        %s229 = sand.u32 %s20, 1
        %s230 = scalar_lea.sflag [#allocation7], %s229
        %s231 = sand.u32 %s66, 1
        %s232 = smul.addr %s231, 8
        %s233 = scalar_lea.vmem [#allocation6], %s232
        // Predicated region
        $region37: #{tpu_custom_call.1} parent=31 // pred_check
          %p234 = pneg %p79
        $region38: #{tpu_custom_call.1} parent=31 // pred_check_branch
          %236 = sbr.rel (%p234) target = $region40
        $region39: #{tpu_custom_call.1} parent=31 // pred_region
          %237 = dma.done %s230, 128
        $region40: #{tpu_custom_call.1} parent=31 // pred_fallthru
          _
        %s238 = sand.u32 %s20, 1
        %s239 = scalar_lea.sflag [#allocation7], %s238
        %s240 = sand.u32 %s92, 1
        %s241 = smul.addr %s240, 8
        %s242 = scalar_lea.vmem [#allocation8], %s241
        // Predicated region
        $region41: #{tpu_custom_call.1} parent=31 // pred_check
          %p243 = pneg %p105
        $region42: #{tpu_custom_call.1} parent=31 // pred_check_branch
          %245 = sbr.rel (%p243) target = $region44
        $region43: #{tpu_custom_call.1} parent=31 // pred_region
          %246 = dma.done %s239, 128
        $region44: #{tpu_custom_call.1} parent=31 // pred_fallthru
          _
        %s247 = sand.u32 %s40, 1
        %s248 = scalar_lea.sflag [#allocation5], %s247
        %s249 = sand.u32 %s40, 1
        %s250 = smul.addr %s249, 16
        %s251 = scalar_lea.vmem [#allocation4], %s250
        %p252 = pneg %p53
        %p253 = pneg %p50
        %s254 = sand.u32 %s20, 1
        %s255 = scalar_lea.sflag [#allocation7], %s254
        %s256 = sand.u32 %s66, 1
        %s257 = smul.addr %s256, 8
        %s258 = scalar_lea.vmem [#allocation6], %s257
        %p259 = pneg %p79
        %p260 = pneg %p76
        %s261 = sand.u32 %s20, 1
        %s262 = scalar_lea.sflag [#allocation7], %s261
        %s263 = sand.u32 %s92, 1
        %s264 = smul.addr %s263, 8
        %s265 = scalar_lea.vmem [#allocation8], %s264
        %p266 = pneg %p105
        %p267 = pneg %p102
        %p268 = pneg %p131
        %p269 = pneg %p128
        %s270 = smul.u32 2, %s24
        %p271 = scmp.lt.s32.totalorder %s270, 3
        %s272 = scalar_select %p271, %s270, 3
        %s273 = smul.addr %s272, 8
        %s274 = scalar_lea.vmem %s3, %s273
        %s275 = smul.u32 2, %s24
        %s276 = smul.u32 2, %s24
        %s277 = smul.u32 2, %s25
        %s278 = smul.u32 2, %s24
        %p279 = scmp.lt.s32.totalorder %s278, 3
        %s280 = scalar_select %p279, %s278, 3
        %s281 = smul.addr %s280, 8
        %s282 = scalar_lea.vmem %s3, %s281
        %s283 = smul.u32 2, %s24
        %p285 = scmp.eq.s32.totalorder %s25, 0
        // Predicated region
        $region45: #{tpu_custom_call.1} parent=31 // pred_check
          %p286 = pneg %p285
        $region46: #{tpu_custom_call.1} parent=31 // pred_check_branch
          %288 = sbr.rel (%p286) target = $region48
        $region47: #{tpu_custom_call.1} parent=31 // pred_region
          %vm289 = vcmask 7168
          %290 = vst.msk [vmem:[#allocation2] sm:$0xff] %vm289, -inf
          %291 = vst.msk [vmem:[#allocation2 + $0x8] sm:$0xff] %vm289, -inf
          %292 = vst.msk [vmem:[#allocation3] sm:$0xff] %vm289, 0.0
          %293 = vst.msk [vmem:[#allocation3 + $0x8] sm:$0xff] %vm289, 0.0
        $region48: #{tpu_custom_call.1} parent=31 // pred_fallthru
          _
        %v294 = vld [vmem:[%s224] sm:$0xff]
        %v295 = vld [vmem:[%s224 + $0x8] sm:$0xff]
        %v296 = vmul.f32 %v294, %v294
        %v297 = vmul.f32 %v295, %v295
        %vm298 = vcmask 261120
        %v299 = vsel %vm298, %v296, 0.0
        %300 = vadd.xlane.f32.xlu0 %v299
        %v301 = vpop.xlane.xlu0 %300
        %v302 = vsel %vm298, %v297, 0.0
        %303 = vadd.xlane.f32.xlu0 %v302
        %v304 = vpop.xlane.xlu0 %303
        %v305 = vmax.f32 %v301, 1e-24
        %v306 = vmax.f32 %v304, 1e-24
        %v307 = vrsqrt.pop %v305
        %v308 = vrsqrt.pop %v306
        %v309 = vmul.f32 %v307, 2.0
        %v310 = vmul.f32 %v308, 2.0
        %v311 = vmul.f32 %v294, %v309
        %v312 = vmul.f32 %v295, %v310
        %v313 = vpack.c.bf16 %v312, %v311
        %v314 = vld [vmem:[%s242] sm:$0xf]
        %v315 = vld [vmem:[%s242 + $0x4] sm:$0xf]
        %v318 = vunpack.c.l.b16 %v314
        %v319 = vunpack.c.l.b16 %v315
        %v320 = vpack.c.b16 %v319, %v318
        %v322 = vsel %vm298, %v313, 0
        %v325 = vsel %vm298, %v320, 0
        %327 = vmatprep.subr.bf16.mxu0 0
        %328 = vmatpush1.bf16.xpose.msra.mxu0 %v325
        %329 = vmatprep.subr.bf16.mxu0 0
        %330 = vmatpush1.bf16.xpose.msra.mxu0 0
        %331 = vmatprep.subr.bf16.mxu0 0
        %332 = vmatpush1.bf16.xpose.msra.mxu0 0
        %333 = vmatprep.subr.bf16.mxu0 0
        %334 = vmatpush1.bf16.xpose.msra.mxu0 0
        %335 = vmatprep.subr.bf16.mxu0 0
        %336 = vmatpush1.bf16.xpose.msra.mxu0 0
        %337 = vmatprep.subr.bf16.mxu0 0
        %338 = vmatpush1.bf16.xpose.msra.mxu0 0
        %339 = vmatprep.subr.bf16.mxu0 0
        %340 = vmatpush1.bf16.xpose.msra.mxu0 0
        %341 = vmatprep.subr.bf16.mxu0 0
        %342 = vmatpush1.bf16.xpose.msra.mxu0 0
        %343 = vmatprep.subr.bf16.mxu0 0
        %344 = vmatpush1.bf16.xpose.msra.mxu0 0
        %345 = vmatprep.subr.bf16.mxu0 0
        %346 = vmatpush1.bf16.xpose.msra.mxu0 0
        %347 = vmatprep.subr.bf16.mxu0 0
        %348 = vmatpush1.bf16.xpose.msra.mxu0 0
        %349 = vmatprep.subr.bf16.mxu0 0
        %350 = vmatpush1.bf16.xpose.msra.mxu0 0
        %351 = vmatprep.subr.bf16.mxu0 0
        %352 = vmatpush1.bf16.xpose.msra.mxu0 0
        %353 = vmatprep.subr.bf16.mxu0 0
        %354 = vmatpush1.bf16.xpose.msra.mxu0 0
        %355 = vmatprep.subr.bf16.mxu0 0
        %356 = vmatpush1.bf16.xpose.msra.mxu0 0
        %357 = vmatprep.subr.bf16.mxu0 0
        %358 = vmatpush1.bf16.xpose.msra.mxu0 0
        %359 = vmatprep.mubr.bf16.mxu0 0
        %360 = vmatmul.mubr.bf16.gmra.mrb[0].mxu0 %v322
        %v361 = vpop.f32.mrb[0].mxu0
        %v362 = vadd.f32 0.0, %v361
        %v363 = vpop.f32.mrb[0].mxu0
        %v364 = vpop.f32.mrb[0].mxu0
        %v365 = vadd.f32 0.0, %v364
        %v366 = vpop.f32.mrb[0].mxu0
        %367 = vdwg.mxu0
        %v368 = vld [vmem:[#allocation2] sm:$0xff]
        %v369 = vld [vmem:[#allocation2 + $0x8] sm:$0xff]
        %vm370 = vcmask 130048
        %v371 = vsel %vm370, %v362, -inf
        %372 = vmax.xlane.f32.xlu0 %v371
        %v373 = vpop.xlane.xlu0 %372
        %v374 = vsel %vm370, %v365, -inf
        %375 = vmax.xlane.f32.xlu0 %v374
        %v376 = vpop.xlane.xlu0 %375
        %v377 = vmax.f32 %v368, %v373
        %v378 = vmax.f32 %v369, %v376
        %v379 = vsub.f32 %v368, %v377
        %v380 = vsub.f32 %v369, %v378
        %v381 = vmul.f32 %v379, 1.442695
        %v382 = vpow.pop %v381
        %v383 = vmul.f32 %v380, 1.442695
        %v384 = vpow.pop %v383
        %v385 = vld [vmem:[#allocation3] sm:$0xff]
        %v386 = vld [vmem:[#allocation3 + $0x8] sm:$0xff]
        %v387 = vmul.f32 %v382, %v385
        %v388 = vmul.f32 %v384, %v386
        %390 = vset.pattern.permute.xlu0 0
        %391 = vperm.xlu0 %390, %v377
        %v392 = vpop.permute.xlu0 %391
        %395 = vset.pattern.permute.xlu0 0
        %396 = vperm.xlu0 %395, %v378
        %v397 = vpop.permute.xlu0 %396
        %v399 = vsub.f32 %v362, %v392
        %v400 = vsub.f32 %v365, %v397
        %v401 = vmul.f32 %v399, 1.442695
        %v402 = vpow.pop %v401
        %v403 = vmul.f32 %v400, 1.442695
        %v404 = vpow.pop %v403
        %v405 = vsel %vm370, %v402, 0.0
        %406 = vadd.xlane.f32.xlu0 %v405
        %v407 = vpop.xlane.xlu0 %406
        %v408 = vsel %vm370, %v404, 0.0
        %409 = vadd.xlane.f32.xlu0 %v408
        %v410 = vpop.xlane.xlu0 %409
        %v411 = vadd.f32 %v387, %v407
        %v412 = vadd.f32 %v388, %v410
        %vm413 = vcmask 7168
        %414 = vst.msk [vmem:[#allocation3] sm:$0xff] %vm413, %v411
        %415 = vst.msk [vmem:[#allocation3 + $0x8] sm:$0xff] %vm413, %v412
        %416 = vst.msk [vmem:[#allocation2] sm:$0xff] %vm413, %v377
        %417 = vst.msk [vmem:[#allocation2 + $0x8] sm:$0xff] %vm413, %v378
        %p418 = scmp.eq.s32.totalorder %s25, 1
        // Predicated region
        $region49: #{tpu_custom_call.1} parent=31 // pred_check
          %p419 = pneg %p418
        $region50: #{tpu_custom_call.1} parent=31 // pred_check_branch
          %421 = sbr.rel (%p419) target = $region52
        $region51: #{tpu_custom_call.1} parent=31 // pred_region
          %v422 = vunpack.c.l.bf16 %v313
          %v423 = vunpack.c.h.bf16 %v313
          %v424 = vld [vmem:[%s233] sm:$0xf]
          %v425 = vld [vmem:[%s233 + $0x4] sm:$0xf]
          %v426 = vunpack.c.l.bf16 %v424
          %v427 = vunpack.c.l.bf16 %v425
          %v428 = vmul.f32 %v422, %v426
          %v429 = vmul.f32 %v423, %v427
          %v430 = vsel %vm298, %v428, 0.0
          %431 = vadd.xlane.f32.xlu0 %v430
          %v432 = vpop.xlane.xlu0 %431
          %v433 = vsel %vm298, %v429, 0.0
          %434 = vadd.xlane.f32.xlu0 %v433
          %v435 = vpop.xlane.xlu0 %434
          %v436 = vld [vmem:[#allocation2] sm:$0xff]
          %v437 = vld [vmem:[#allocation2 + $0x8] sm:$0xff]
          %v438 = vld [vmem:[#allocation3] sm:$0xff]
          %v439 = vld [vmem:[#allocation3 + $0x8] sm:$0xff]
          %v440 = vlog2.pop %v438
          %v441 = vmul.f32 %v440, 0.6931472
          %v442 = vlog2.pop %v439
          %v443 = vmul.f32 %v442, 0.6931472
          %v444 = vadd.f32 %v436, %v441
          %v445 = vadd.f32 %v437, %v443
          %v446 = vsub.f32 %v444, %v432
          %v447 = vsub.f32 %v445, %v435
          %448 = vst.msk [vmem:[%s282] sm:$0xff] %vm413, %v446
          %449 = vst.msk [vmem:[%s282 + $0x8] sm:$0xff] %vm413, %v447
        $region52: #{tpu_custom_call.1} parent=31 // pred_fallthru
          _
        %s450 = smul.u32 2, %s24
        %p451 = scmp.lt.s32.totalorder %s450, 3
        %s452 = scalar_select %p451, %s450, 3
        %s453 = smul.addr %s452, 8
        %s454 = scalar_lea.vmem %s3, %s453
        // Predicated region
        $region53: #{tpu_custom_call.1} parent=31 // pred_check
          %p455 = pneg %p128
        $region54: #{tpu_custom_call.1} parent=31 // pred_check_branch
          %457 = sbr.rel (%p455) target = $region56
        $region55: #{tpu_custom_call.1} parent=31 // pred_region
          %s458 = smul.u32 2, %s24
        $region56: #{tpu_custom_call.1} parent=31 // pred_fallthru
          _
      $region32: #{tpu_custom_call.1} parent=5 // pred_fallthru
        _
      %p459 = scmp.le.s32.totalorder 2, %s15
      // Predicated region
      $region57: #{tpu_custom_call.1} parent=5 // pred_check
        %p460 = pneg %p459
      $region58: #{tpu_custom_call.1} parent=5 // pred_check_branch
        %462 = sbr.rel (%p460) target = $region60
      $region59: #{tpu_custom_call.1} parent=5 // pred_region
        %s463 = ssub.s32 %s15, 2
        // Predicated region
        $region61: #{tpu_custom_call.1} parent=59 // pred_check
          %p464 = pneg %p134
        $region62: #{tpu_custom_call.1} parent=59 // pred_check_branch
          %466 = sbr.rel (%p464) target = $region64
        $region63: #{tpu_custom_call.1} parent=59 // pred_region
          %s467 = smul.u32 2, %s26
          %p468 = scmp.lt.s32.totalorder %s467, 3
          %s469 = scalar_select %p468, %s467, 3
          %s470 = smul.addr %s469, 8
          %s471 = scalar_lea.vmem %s3, %s470
        $region64: #{tpu_custom_call.1} parent=59 // pred_fallthru
          _
      $region60: #{tpu_custom_call.1} parent=5 // pred_fallthru
        _
    $region6: #{tpu_custom_call.1} parent=1 // loop_footer
      %s19 = sadd.s32 1, %s15
    $region7: #{tpu_custom_call.1} parent=1 // loop_footer_branch
      %14 = sbr.rel target = $region3
    $region8: #{tpu_custom_call.1} parent=1 // loop_exit
      _
    %472 = vsyncpa [#allocation5], 1
    %s473 = scalar_lea.sflag [#allocation5], 1
    %474 = vsyncpa %s473, 1
    %475 = vsyncpa [#allocation7], 1
    %s476 = scalar_lea.sflag [#allocation7], 1
    %477 = vsyncpa %s476, 1

</llo_original>
